<compile_context>
chip_gen: v7x
topology: tpu7x:2x2x1
jax: 0.10.0
libtpu: 0.0.40
codegen_flags: <defaults>
</compile_context>

<pallas_src>
import functools
import math

import jax
import jax.numpy as jnp
from jax.experimental import pallas as pl
from jax.experimental.pallas import tpu as pltpu


def _flash_body(q_ref, k_ref, v_ref, mask_ref, o_ref, m_sc, l_sc, acc_sc, *,
                scale, mask_mode, tq, tk, cast_bf16):
    """One (q-tile, kv-tile) step of online-softmax attention for hb heads."""
    ki = pl.program_id(3)

    @pl.when(ki == 0)
    def _():
        m_sc[...] = jnp.full_like(m_sc, -jnp.inf)
        l_sc[...] = jnp.zeros_like(l_sc)
        acc_sc[...] = jnp.zeros_like(acc_sc)

    q = q_ref[0]  # (hb, tq, D)  native dtype
    k = k_ref[0]  # (hb, tk, D)
    v = v_ref[0]  # (hb, tk, D)

    # Fold the 1/sqrt(d_k) scale into q (O(tq*D), cheaper than scaling scores).
    qs = q * jnp.asarray(scale, dtype=q.dtype)

    # bf16-native MXU: cast QK^T operands to bf16, accumulate in f32.
    if cast_bf16 and qs.dtype == jnp.float32:
        qs = qs.astype(jnp.bfloat16)
        k = k.astype(jnp.bfloat16)

    # scores = q @ k^T, contracting the last dim of both operands (no k.T).
    s = jnp.einsum(
        "hqd,hkd->hqk", qs, k, preferred_element_type=jnp.float32
    )  # (hb, tq, tk) f32

    if mask_mode == "tile":
        m = mask_ref[0]  # (tq, tk) int8, shared across hb heads
        s = jnp.where(m[None, :, :] == 0, jnp.float32(-1e9), s)
    elif mask_mode == "full":
        # Whole per-batch [S, S] mask is resident; slice the (tq, tk) window.
        qi = pl.program_id(2)
        q0 = pl.multiple_of(qi * tq, tq)
        k0 = pl.multiple_of(ki * tk, tk)
        m = mask_ref[0, pl.ds(q0, tq), pl.ds(k0, tk)]  # (tq, tk) int8
        s = jnp.where(m[None, :, :] == 0, jnp.float32(-1e9), s)

    # Online (numerically stable) softmax update.
    m_prev = m_sc[...]
    m_new = jnp.maximum(m_prev, jnp.max(s, axis=-1, keepdims=True))
    alpha = jnp.exp(m_prev - m_new)
    p = jnp.exp(s - m_new)  # f32
    l_sc[...] = alpha * l_sc[...] + jnp.sum(p, axis=-1, keepdims=True)

    if cast_bf16:
        p_mm = p.astype(jnp.bfloat16)
        v_mm = v if v.dtype == jnp.bfloat16 else v.astype(jnp.bfloat16)
    else:
        p_mm = p.astype(v.dtype)
        v_mm = v

    acc_sc[...] = alpha * acc_sc[...] + jnp.einsum(
        "hqk,hkd->hqd", p_mm, v_mm, preferred_element_type=jnp.float32
    )
    m_sc[...] = m_new

    @pl.when(ki == pl.num_programs(3) - 1)
    def _():
        # EUP approximate reciprocal + one Newton refinement (O(tq) elements).
        l = l_sc[...]
        inv = pl.reciprocal(l, approx=True)
        inv = inv * (2.0 - l * inv)
        o_ref[0] = (acc_sc[...] * inv).astype(o_ref.dtype)


def _kernel_no_mask(q_ref, k_ref, v_ref, o_ref, m_sc, l_sc, acc_sc, **kw):
    _flash_body(q_ref, k_ref, v_ref, None, o_ref, m_sc, l_sc, acc_sc, **kw)


def _kernel_with_mask(q_ref, k_ref, v_ref, mask_ref, o_ref, m_sc, l_sc, acc_sc, **kw):
    _flash_body(q_ref, k_ref, v_ref, mask_ref, o_ref, m_sc, l_sc, acc_sc, **kw)


def _pick_tile(S, cap):
    """Largest multiple-of-8 tile <= cap that divides S; else the full S."""
    if S <= cap:
        return S
    for t in range(cap, 0, -8):
        if t % 8 == 0 and S % t == 0:
            return t
    # TODO(synk): ragged S falls back to a full-sequence tile (see header).
    return S


def scaled_dot_product_attention(queries, keys, values, mask=None,
                                 *, q_tile=512, kv_tile=256, mxu_bf16=True):
    """queries/keys/values: [B, H, S, D]; mask: optional [B, S, S] (0 = masked)."""
    B, H, S, D = queries.shape
    scale = 1.0 / math.sqrt(D)

    tq = _pick_tile(S, q_tile)
    tk = _pick_tile(S, kv_tile)
    nq = S // tq
    nk = S // tk

    # Generation-aware VMEM capacity (v5e/v6e 128 MiB, v7x 64 MiB).
    try:
        vmem_cap = int(pltpu.get_tpu_info().vmem_capacity_bytes)
    except Exception:  # pragma: no cover - conservative fallback
        vmem_cap = 64 * 1024 * 1024

    # Graded head batching: largest divisor of H whose f32 score/prob
    # footprint (s and p live simultaneously) fits the per-step budget.
    score_budget = 2 * 1024 * 1024 if vmem_cap <= 64 * 1024 * 1024 else 4 * 1024 * 1024
    hb = 1
    for cand in range(H, 0, -1):
        if H % cand == 0 and 2 * cand * tq * tk * 4 <= score_budget:
            hb = cand
            break
    # Megacore balance (v7x: 2 TCs): keep >=2 parallel units of work if possible.
    if B * (H // hb) * nq < 2:
        for cand in range(hb - 1, 0, -1):
            if H % cand == 0:
                hb = cand
                break
    nh = H // hb

    grid = (B, nh, nq, nk)

    q_spec = pl.BlockSpec((1, hb, tq, D), lambda b, h, qi, ki: (b, h, qi, 0))
    kv_spec = pl.BlockSpec((1, hb, tk, D), lambda b, h, qi, ki: (b, h, ki, 0))
    out_spec = pl.BlockSpec((1, hb, tq, D), lambda b, h, qi, ki: (b, h, qi, 0))
    out_shape = jax.ShapeDtypeStruct((B, H, S, D), queries.dtype)

    scratch = [
        pltpu.VMEM((hb, tq, 1), jnp.float32),  # running max
        pltpu.VMEM((hb, tq, 1), jnp.float32),  # running sum
        pltpu.VMEM((hb, tq, D), jnp.float32),  # output accumulator
    ]

    # Mask handling: keep [B, S, S] int8 in HBM (no per-head replication).
    # If the per-batch mask fits comfortably in VMEM, keep the whole thing
    # resident (block index constant -> one DMA per batch) and slice (tq,tk)
    # windows in-kernel; otherwise stream (tq,tk) tiles.
    mask_mode = "none"
    mask_spec = None
    mask_i8 = None
    if mask is not None:
        mask_i8 = mask.astype(jnp.int8)
        if S * S <= 2 * 1024 * 1024:
            mask_mode = "full"
            mask_spec = pl.BlockSpec((1, S, S), lambda b, h, qi, ki: (b, 0, 0))
        else:
            mask_mode = "tile"
            mask_spec = pl.BlockSpec((1, tq, tk), lambda b, h, qi, ki: (b, qi, ki))

    # Explicit VMEM budget: double-buffered q/k/v/out blocks, f32 scratch,
    # f32 s/p intermediates (compiler scratch), mask block; 2x headroom,
    # clamped to 75% of physical capacity (v7x-safe, full use on v5e/v6e).
    itemsize = jnp.dtype(queries.dtype).itemsize
    est = 2 * (2 * hb * tq * D + 2 * hb * tk * D) * itemsize    # q,out,k,v blocks
    est += 4 * hb * tq * (D + 2)                                # f32 scratch
    est += 2 * hb * tq * tk * 4                                 # s and p f32
    if mask_mode == "full":
        est += 2 * S * S
    elif mask_mode == "tile":
        est += 2 * tq * tk
    vmem_limit = int(min(max(2 * est, 16 * 1024 * 1024), 0.75 * vmem_cap))

    cparams = pltpu.CompilerParams(
        dimension_semantics=("parallel", "parallel", "parallel", "arbitrary"),
        vmem_limit_bytes=vmem_limit,
    )

    common_kw = dict(scale=scale, mask_mode=mask_mode, tq=tq, tk=tk,
                     cast_bf16=mxu_bf16)
    if mask is None:
        kernel = functools.partial(_kernel_no_mask, **common_kw)
        in_specs = [q_spec, kv_spec, kv_spec]
        args = (queries, keys, values)
    else:
        kernel = functools.partial(_kernel_with_mask, **common_kw)
        in_specs = [q_spec, kv_spec, kv_spec, mask_spec]
        args = (queries, keys, values, mask_i8)

    return pl.pallas_call(
        kernel,
        out_shape=out_shape,
        grid_spec=pltpu.PrefetchScalarGridSpec(
            num_scalar_prefetch=0,
            grid=grid,
            in_specs=in_specs,
            out_specs=out_spec,
            scratch_shapes=scratch,
        ),
        compiler_params=cparams,
    )(*args)


def _reference(queries, keys, values, mask=None):
    d_k = queries.shape[-1]
    scores = jnp.einsum("bhqd,bhkd->bhqk", queries, keys) / jnp.sqrt(jnp.float32(d_k))
    if mask is not None:
        scores = jnp.where(mask[:, None, :, :] == 0, -1e9, scores)
    attn = jax.nn.softmax(scores, axis=-1)
    return jnp.einsum("bhqk,bhkd->bhqd", attn, values)


if __name__ == "__main__":
    key = jax.random.PRNGKey(0)
    kq, kk, kv, km = jax.random.split(key, 4)

    B, H, S, D = 2, 4, 8, 32
    queries = jax.random.normal(kq, (B, H, S, D), dtype=jnp.float32)
    keys = jax.random.normal(kk, (B, H, S, D), dtype=jnp.float32)
    values = jax.random.normal(kv, (B, H, S, D), dtype=jnp.float32)
    mask = (jax.random.uniform(km, (B, S, S)) > 0.3).astype(jnp.int32)

    ref = _reference(queries, keys, values)
    ref_m = _reference(queries, keys, values, mask)

    # Exact (f32 MXU) path — tight tolerance.
    out = jax.block_until_ready(
        scaled_dot_product_attention(queries, keys, values, mxu_bf16=False))
    assert jnp.allclose(out, ref, atol=1e-4, rtol=1e-4), "no-mask (f32) mismatch"
    out_m = jax.block_until_ready(
        scaled_dot_product_attention(queries, keys, values, mask, mxu_bf16=False))
    assert jnp.allclose(out_m, ref_m, atol=1e-4, rtol=1e-4), "masked (f32) mismatch"

    # Default fast path (bf16 MXU operands, f32 accumulation) — flash-attn
    # precision tradeoff, looser tolerance vs the pure-f32 reference.
    out_b = jax.block_until_ready(
        scaled_dot_product_attention(queries, keys, values))
    assert jnp.allclose(out_b, ref, atol=3e-2, rtol=3e-2), "no-mask (bf16) mismatch"
    out_mb = jax.block_until_ready(
        scaled_dot_product_attention(queries, keys, values, mask))
    assert jnp.allclose(out_mb, ref_m, atol=3e-2, rtol=3e-2), "masked (bf16) mismatch"

    print("KERNEL_OK")
</pallas_src>

<mosaic_0001>
module attributes {stable_mosaic.version = 11 : i64} {
  func.func @_kernel_no_mask(%arg0: i32, %arg1: i32, %arg2: i32, %arg3: i32, %arg4: memref<1x4x8x32xf32, #tpu.memory_space<vmem>>, %arg5: memref<1x4x8x32xf32, #tpu.memory_space<vmem>>, %arg6: memref<1x4x8x32xf32, #tpu.memory_space<vmem>>, %arg7: memref<1x4x8x32xf32, #tpu.memory_space<vmem>>, %arg8: memref<4x8x1xf32, #tpu.memory_space<vmem>>, %arg9: memref<4x8x1xf32, #tpu.memory_space<vmem>>, %arg10: memref<4x8x32xf32, #tpu.memory_space<vmem>>) attributes {dimension_semantics = [#tpu.dimension_semantics<parallel>, #tpu.dimension_semantics<parallel>, #tpu.dimension_semantics<parallel>, #tpu.dimension_semantics<arbitrary>], iteration_bounds = array<i64: 2, 1, 1, 1>, scalar_prefetch = 0 : i64, scratch_operands = 3 : i64, tpu.core_type = #tpu.core_type<tc>, window_params = [{transform_indices = @transform_0, window_bounds = array<i64: 1, 4, 8, 32>}, {transform_indices = @transform_1, window_bounds = array<i64: 1, 4, 8, 32>}, {transform_indices = @transform_2, window_bounds = array<i64: 1, 4, 8, 32>}, {transform_indices = @transform_3, window_bounds = array<i64: 1, 4, 8, 32>}]} {
    %c0_i32 = arith.constant 0 : i32
    %0 = arith.cmpi eq, %arg3, %c0_i32 : i32
    %1 = arith.extui %0 : i1 to i32
    %c0_i32_0 = arith.constant 0 : i32
    %2 = arith.cmpi ne, %1, %c0_i32_0 : i32
    scf.if %2 {
      %cst_36 = arith.constant 0xFF800000 : f32
      %37 = vector.broadcast %cst_36 : f32 to vector<4x8x1xf32>
      %c0_37 = arith.constant 0 : index
      %c0_38 = arith.constant 0 : index
      %c0_39 = arith.constant 0 : index
      %38 = vector.load %arg8[%c0_37, %c0_38, %c0_39] : memref<4x8x1xf32, #tpu.memory_space<vmem>>, vector<4x8x1xf32>
      tpu.vector_store %arg8[%c0_37, %c0_38, %c0_39], %37 {strides = array<i32>} : memref<4x8x1xf32, #tpu.memory_space<vmem>>, vector<4x8x1xf32>,
      %cst_40 = arith.constant 0.000000e+00 : f32
      %39 = vector.broadcast %cst_40 : f32 to vector<4x8x1xf32>
      %c0_41 = arith.constant 0 : index
      %c0_42 = arith.constant 0 : index
      %c0_43 = arith.constant 0 : index
      %40 = vector.load %arg9[%c0_41, %c0_42, %c0_43] : memref<4x8x1xf32, #tpu.memory_space<vmem>>, vector<4x8x1xf32>
      tpu.vector_store %arg9[%c0_41, %c0_42, %c0_43], %39 {strides = array<i32>} : memref<4x8x1xf32, #tpu.memory_space<vmem>>, vector<4x8x1xf32>,
      %cst_44 = arith.constant 0.000000e+00 : f32
      %41 = vector.broadcast %cst_44 : f32 to vector<4x8x32xf32>
      %c0_45 = arith.constant 0 : index
      %c0_46 = arith.constant 0 : index
      %c0_47 = arith.constant 0 : index
      %42 = vector.load %arg10[%c0_45, %c0_46, %c0_47] : memref<4x8x32xf32, #tpu.memory_space<vmem>>, vector<4x8x32xf32>
      tpu.vector_store %arg10[%c0_45, %c0_46, %c0_47], %41 {strides = array<i32>} : memref<4x8x32xf32, #tpu.memory_space<vmem>>, vector<4x8x32xf32>,
    } else {
    }
    %c0 = arith.constant 0 : index
    %c0_1 = arith.constant 0 : index
    %c0_2 = arith.constant 0 : index
    %c0_3 = arith.constant 0 : index
    %3 = vector.load %arg4[%c0, %c0_1, %c0_2, %c0_3] : memref<1x4x8x32xf32, #tpu.memory_space<vmem>>, vector<1x4x8x32xf32>
    %4 = vector.shape_cast %3 : vector<1x4x8x32xf32> to vector<4x8x32xf32>
    %c0_4 = arith.constant 0 : index
    %c0_5 = arith.constant 0 : index
    %c0_6 = arith.constant 0 : index
    %c0_7 = arith.constant 0 : index
    %5 = vector.load %arg5[%c0_4, %c0_5, %c0_6, %c0_7] : memref<1x4x8x32xf32, #tpu.memory_space<vmem>>, vector<1x4x8x32xf32>
    %6 = vector.shape_cast %5 : vector<1x4x8x32xf32> to vector<4x8x32xf32>
    %c0_8 = arith.constant 0 : index
    %c0_9 = arith.constant 0 : index
    %c0_10 = arith.constant 0 : index
    %c0_11 = arith.constant 0 : index
    %7 = vector.load %arg6[%c0_8, %c0_9, %c0_10, %c0_11] : memref<1x4x8x32xf32, #tpu.memory_space<vmem>>, vector<1x4x8x32xf32>
    %8 = vector.shape_cast %7 : vector<1x4x8x32xf32> to vector<4x8x32xf32>
    %cst = arith.constant 0.176776692 : f32
    %9 = vector.broadcast %cst : f32 to vector<4x8x32xf32>
    %10 = arith.mulf %4, %9 : vector<4x8x32xf32>
    "tpu.trace_start"() <{level = 10 : i32, message = "hqd,hkd->hqk"}> : () -> ()
    %cst_12 = arith.constant dense<0.000000e+00> : vector<4x8x8xf32>
    %11 = tpu.matmul %10, %6, %cst_12 {dimension_numbers = #tpu.dot_dimension_numbers<[2], [2], [1], [1], [0, 0, 0, 1, 1, 1], [0], [0]>} : vector<4x8x32xf32>, vector<4x8x32xf32>, vector<4x8x8xf32> -> vector<4x8x8xf32>
    "tpu.trace_stop"() : () -> ()
    %c0_13 = arith.constant 0 : index
    %c0_14 = arith.constant 0 : index
    %c0_15 = arith.constant 0 : index
    %12 = vector.load %arg8[%c0_13, %c0_14, %c0_15] : memref<4x8x1xf32, #tpu.memory_space<vmem>>, vector<4x8x1xf32>
    %cst_16 = arith.constant dense<0xFF800000> : vector<4x8xf32>
    %13 = vector.multi_reduction <maximumf>, %11, %cst_16 [2] : vector<4x8x8xf32> to vector<4x8xf32>
    %14 = vector.shape_cast %13 : vector<4x8xf32> to vector<4x8x1xf32>
    %15 = arith.maximumf %12, %14 : vector<4x8x1xf32>
    %16 = arith.subf %12, %15 : vector<4x8x1xf32>
    %17 = math.exp %16 : vector<4x8x1xf32>
    %18 = vector.broadcast %15 : vector<4x8x1xf32> to vector<4x8x8xf32>
    %19 = arith.subf %11, %18 : vector<4x8x8xf32>
    %20 = math.exp %19 : vector<4x8x8xf32>
    %c0_17 = arith.constant 0 : index
    %c0_18 = arith.constant 0 : index
    %c0_19 = arith.constant 0 : index
    %21 = vector.load %arg9[%c0_17, %c0_18, %c0_19] : memref<4x8x1xf32, #tpu.memory_space<vmem>>, vector<4x8x1xf32>
    %22 = arith.mulf %17, %21 : vector<4x8x1xf32>
    %cst_20 = arith.constant dense<0.000000e+00> : vector<4x8xf32>
    %23 = vector.multi_reduction <add>, %20, %cst_20 [2] : vector<4x8x8xf32> to vector<4x8xf32>
    %24 = vector.shape_cast %23 : vector<4x8xf32> to vector<4x8x1xf32>
    %25 = arith.addf %22, %24 : vector<4x8x1xf32>
    %c0_21 = arith.constant 0 : index
    %c0_22 = arith.constant 0 : index
    %c0_23 = arith.constant 0 : index
    %26 = vector.load %arg9[%c0_21, %c0_22, %c0_23] : memref<4x8x1xf32, #tpu.memory_space<vmem>>, vector<4x8x1xf32>
    tpu.vector_store %arg9[%c0_21, %c0_22, %c0_23], %25 {strides = array<i32>} : memref<4x8x1xf32, #tpu.memory_space<vmem>>, vector<4x8x1xf32>,
    %c0_24 = arith.constant 0 : index
    %c0_25 = arith.constant 0 : index
    %c0_26 = arith.constant 0 : index
    %27 = vector.load %arg10[%c0_24, %c0_25, %c0_26] : memref<4x8x32xf32, #tpu.memory_space<vmem>>, vector<4x8x32xf32>
    %28 = vector.broadcast %17 : vector<4x8x1xf32> to vector<4x8x32xf32>
    %29 = arith.mulf %28, %27 : vector<4x8x32xf32>
    "tpu.trace_start"() <{level = 10 : i32, message = "hqk,hkd->hqd"}> : () -> ()
    %cst_27 = arith.constant dense<0.000000e+00> : vector<4x8x32xf32>
    %30 = tpu.matmul %20, %8, %cst_27 {dimension_numbers = #tpu.dot_dimension_numbers<[2], [1], [1], [2], [0, 0, 0, 1, 1, 2], [0], [0]>} : vector<4x8x8xf32>, vector<4x8x32xf32>, vector<4x8x32xf32> -> vector<4x8x32xf32>
    "tpu.trace_stop"() : () -> ()
    %31 = arith.addf %29, %30 : vector<4x8x32xf32>
    %c0_28 = arith.constant 0 : index
    %c0_29 = arith.constant 0 : index
    %c0_30 = arith.constant 0 : index
    %32 = vector.load %arg10[%c0_28, %c0_29, %c0_30] : memref<4x8x32xf32, #tpu.memory_space<vmem>>, vector<4x8x32xf32>
    tpu.vector_store %arg10[%c0_28, %c0_29, %c0_30], %31 {strides = array<i32>} : memref<4x8x32xf32, #tpu.memory_space<vmem>>, vector<4x8x32xf32>,
    %c0_31 = arith.constant 0 : index
    %c0_32 = arith.constant 0 : index
    %c0_33 = arith.constant 0 : index
    %33 = vector.load %arg8[%c0_31, %c0_32, %c0_33] : memref<4x8x1xf32, #tpu.memory_space<vmem>>, vector<4x8x1xf32>
    tpu.vector_store %arg8[%c0_31, %c0_32, %c0_33], %15 {strides = array<i32>} : memref<4x8x1xf32, #tpu.memory_space<vmem>>, vector<4x8x1xf32>,
    %c0_i32_34 = arith.constant 0 : i32
    %34 = arith.cmpi eq, %arg3, %c0_i32_34 : i32
    %35 = arith.extui %34 : i1 to i32
    %c0_i32_35 = arith.constant 0 : i32
    %36 = arith.cmpi ne, %35, %c0_i32_35 : i32
    scf.if %36 {
      %c0_36 = arith.constant 0 : index
      %c0_37 = arith.constant 0 : index
      %c0_38 = arith.constant 0 : index
      %37 = vector.load %arg9[%c0_36, %c0_37, %c0_38] : memref<4x8x1xf32, #tpu.memory_space<vmem>>, vector<4x8x1xf32>
      %38 = tpu.reciprocal %37 {approx = true} : vector<4x8x1xf32> -> vector<4x8x1xf32>
      %39 = arith.mulf %37, %38 : vector<4x8x1xf32>
      %cst_39 = arith.constant 2.000000e+00 : f32
      %40 = vector.broadcast %cst_39 : f32 to vector<4x8x1xf32>
      %41 = arith.subf %40, %39 : vector<4x8x1xf32>
      %42 = arith.mulf %38, %41 : vector<4x8x1xf32>
      %c0_40 = arith.constant 0 : index
      %c0_41 = arith.constant 0 : index
      %c0_42 = arith.constant 0 : index
      %43 = vector.load %arg10[%c0_40, %c0_41, %c0_42] : memref<4x8x32xf32, #tpu.memory_space<vmem>>, vector<4x8x32xf32>
      %44 = vector.broadcast %42 : vector<4x8x1xf32> to vector<4x8x32xf32>
      %45 = arith.mulf %43, %44 : vector<4x8x32xf32>
      %c0_43 = arith.constant 0 : index
      %c0_44 = arith.constant 0 : index
      %c0_45 = arith.constant 0 : index
      %c0_46 = arith.constant 0 : index
      %46 = vector.load %arg7[%c0_43, %c0_44, %c0_45, %c0_46] : memref<1x4x8x32xf32, #tpu.memory_space<vmem>>, vector<1x4x8x32xf32>
      %47 = vector.shape_cast %46 : vector<1x4x8x32xf32> to vector<4x8x32xf32>
      %48 = vector.shape_cast %45 : vector<4x8x32xf32> to vector<1x4x8x32xf32>
      tpu.vector_store %arg7[%c0_43, %c0_44, %c0_45, %c0_46], %48 {strides = array<i32>} : memref<1x4x8x32xf32, #tpu.memory_space<vmem>>, vector<1x4x8x32xf32>,
    } else {
    }
    return
  }
  func.func @transform_0(%arg0: i32, %arg1: i32, %arg2: i32, %arg3: i32) -> (i32, i32, i32, i32) {
    %c0_i32 = arith.constant 0 : i32
    %c0_i32_0 = arith.constant 0 : i32
    return %arg0, %arg1, %arg2, %c0_i32 : i32, i32, i32, i32
  }
  func.func @transform_1(%arg0: i32, %arg1: i32, %arg2: i32, %arg3: i32) -> (i32, i32, i32, i32) {
    %c0_i32 = arith.constant 0 : i32
    %c0_i32_0 = arith.constant 0 : i32
    return %arg0, %arg1, %arg3, %c0_i32 : i32, i32, i32, i32
  }
  func.func @transform_2(%arg0: i32, %arg1: i32, %arg2: i32, %arg3: i32) -> (i32, i32, i32, i32) {
    %c0_i32 = arith.constant 0 : i32
    %c0_i32_0 = arith.constant 0 : i32
    return %arg0, %arg1, %arg3, %c0_i32 : i32, i32, i32, i32
  }
  func.func @transform_3(%arg0: i32, %arg1: i32, %arg2: i32, %arg3: i32) -> (i32, i32, i32, i32) {
    %c0_i32 = arith.constant 0 : i32
    %c0_i32_0 = arith.constant 0 : i32
    return %arg0, %arg1, %arg2, %c0_i32 : i32, i32, i32, i32
  }
}

</mosaic_0001>

<llo_original>
// kernel: tpu_custom_call.1
$region0: #{tpu_custom_call.1}
  #allocation0 [shape = 'u32[]', space=smem, size = 0x4, offset = 0x4, fixed_abs, tag = 'smem constant byte address 0x4 - core index']
  #allocation1 [shape = 'u32[144,128]{1,0:T(1,128)}', space=vmem, size = 0x12000, scoped, tag = 'internal scratch']
  #allocation2 [shape = 'f32[4,8,1]{2,1,0:T(8,128)}', space=vmem, size = 0x4000, scoped, tag = 'scratch operand']
  #allocation3 [shape = 'f32[4,8,1]{2,1,0:T(8,128)}', space=vmem, size = 0x4000, scoped, tag = 'scratch operand']
  #allocation4 [shape = 'f32[4,8,32]{2,1,0:T(8,128)}', space=vmem, size = 0x4000, scoped, tag = 'scratch operand']
  %s0 = inlined_call_operand.hbm [shape: f32[2,4,8,32], index: 0, kind: input, shape index: {}]
  %s1 = inlined_call_operand.hbm [shape: f32[2,4,8,32], index: 1, kind: input, shape index: {}]
  %s2 = inlined_call_operand.hbm [shape: f32[2,4,8,32], index: 2, kind: input, shape index: {}]
  %s3 = inlined_call_operand.hbm [shape: f32[2,4,8,32], index: 3, kind: output, shape index: {}]
  %s4 = sld [smem:[#allocation0]]
  $region65: #{tpu_custom_call.1} parent=0
    _
  %s6 = ssub.s32 1, %s4
  %s7 = scalar_select 0, %s6, %s4
  $region1: #{tpu_custom_call.1} parent=0
    #allocation5 [shape = 'u8[32768]{0}', space=vmem, size = 0x8000, scoped, tag = 'input window, operand 0']
    #allocation6 [shape = 's32[2]{0}', space=sflag, size = 0x8, scoped, tag = 'scoped memory for tpu_custom_call.1']
    #allocation7 [shape = 's32[2]{0}', space=sflag, size = 0x8, scoped, tag = 'scoped memory for tpu_custom_call.1']
    #allocation8 [shape = 'u8[32768]{0}', space=vmem, size = 0x8000, scoped, tag = 'input window, operand 1']
    #allocation9 [shape = 's32[2]{0}', space=sflag, size = 0x8, scoped, tag = 'scoped memory for tpu_custom_call.1']
    #allocation10 [shape = 'u8[32768]{0}', space=vmem, size = 0x8000, scoped, tag = 'input window, operand 2']
    #allocation11 [shape = 'u8[32768]{0}', space=vmem, size = 0x8000, scoped, tag = 'output window, operand 0']
    %8 = vsyncpa [#allocation6], 0
    %s9 = scalar_lea.sflag [#allocation6], 1
    %10 = vsyncpa %s9, 0
    %11 = vsyncpa [#allocation9], 0
    %s12 = scalar_lea.sflag [#allocation9], 1
    %13 = vsyncpa %s12, 0
    %14 = vsyncpa [#allocation7], 0
    %s15 = scalar_lea.sflag [#allocation7], 1
    %16 = vsyncpa %s15, 0
    loop: start=0, step=1, limit=4
    $region2: #{tpu_custom_call.1} parent=1 // loop_pre_header
      _
    $region3: #{tpu_custom_call.1} parent=1 // loop_header
      %s18 = sphi 0, %s22
      %p19 = scmp.ge.s32.totalorder %s18, 4
      %s25 = sphi 0, %s51
      %s26 = sphi 0, %s47
      %s27 = sphi 0, %s43
      %s28 = sphi 0, %s39
      %s29 = sphi 0, %s25
      %s30 = sphi 0, %s26
      %s31 = sphi 0, %s27
      %s32 = sphi 0, %s28
      %s33 = sphi 0, %s29
      %s34 = sphi 0, %s30
      %s35 = sphi 0, %s31
      %s36 = sphi 0, %s32
      %s58 = sphi 0, %s60
      %s61 = sphi 0, %s58
      %s62 = sphi 0, %s61
      %s78 = sphi 0, %s62
      %s88 = sphi 0, %s90
      %s91 = sphi 0, %s88
      %s92 = sphi 0, %s91
      %s108 = sphi 0, %s92
      %s118 = sphi 0, %s120
      %s121 = sphi 0, %s118
      %s122 = sphi 0, %s121
      %s138 = sphi 0, %s122
      %s148 = sphi 0, %s150
      %s151 = sphi 0, %s148
      %s152 = sphi 0, %s151
      %s168 = sphi 0, %s152
    $region4: #{tpu_custom_call.1} parent=1 // loop_header_branch
      %21 = sbr.rel (%p19) target = $region8
    $region5: #{tpu_custom_call.1} parent=1 // loop_body
      %s23 = ssub.s32 %s18, 1
      %s24 = ssub.s32 %s18, 2
      %s37 = sadd.s32 1, %s28
      %p38 = scmp.ge.s32.totalorder %s37, 1
      %s39 = scalar_select %p38, 0, %s37
      %s40 = sadd.s32 1, %s27
      %s41 = scalar_select %p38, %s40, %s27
      %p42 = scmp.ge.s32.totalorder %s41, 1
      %s43 = scalar_select %p42, 0, %s41
      %s44 = sadd.s32 1, %s26
      %s45 = scalar_select %p42, %s44, %s26
      %p46 = scmp.ge.s32.totalorder %s45, 1
      %s47 = scalar_select %p46, 0, %s45
      %s48 = sadd.s32 1, %s25
      %s49 = scalar_select %p46, %s48, %s25
      %p50 = scmp.ge.s32.totalorder %s49, 2
      %s51 = scalar_select %p50, 0, %s49
      %s52 = ssub.s32 %s25, %s51
      %s53 = ssub.s32 %s26, %s47
      %s54 = sor.u32 %s52, %s53
      %s55 = ssub.s32 %s27, %s43
      %s56 = sor.u32 %s54, %s55
      %p57 = scmp.eq.s32.totalorder %s56, 0
      %s59 = sadd.s32 %s58, 1
      %s60 = scalar_select %p57, %s58, %s59
      %p63 = pneg %p57
      %p64 = scmp.eq.s32.totalorder %s18, 1
      %p65 = por %p63, %p64
      %p66 = scmp.ne.s32.totalorder %s58, %s61
      %p67 = scmp.eq.s32.totalorder %s18, 0
      %p68 = por %p66, %p67
      %p69 = scmp.ne.s32.totalorder %s58, %s61
      %p70 = scmp.eq.s32.totalorder %s23, 1
      %p71 = por %p69, %p70
      %p72 = scmp.ne.s32.totalorder %s61, %s62
      %p73 = scmp.eq.s32.totalorder %s23, 0
      %p74 = por %p72, %p73
      %p75 = scmp.ne.s32.totalorder %s61, %s62
      %p76 = scmp.eq.s32.totalorder %s24, 1
      %p77 = por %p75, %p76
      %p79 = scmp.ne.s32.totalorder %s62, %s78
      %p80 = scmp.eq.s32.totalorder %s24, 0
      %p81 = por %p79, %p80
      %s82 = ssub.s32 %s25, %s51
      %s83 = ssub.s32 %s26, %s47
      %s84 = sor.u32 %s82, %s83
      %s85 = ssub.s32 %s28, %s39
      %s86 = sor.u32 %s84, %s85
      %p87 = scmp.eq.s32.totalorder %s86, 0
      %s89 = sadd.s32 %s88, 1
      %s90 = scalar_select %p87, %s88, %s89
      %p93 = pneg %p87
      %p94 = scmp.eq.s32.totalorder %s18, 1
      %p95 = por %p93, %p94
      %p96 = scmp.ne.s32.totalorder %s88, %s91
      %p97 = scmp.eq.s32.totalorder %s18, 0
      %p98 = por %p96, %p97
      %p99 = scmp.ne.s32.totalorder %s88, %s91
      %p100 = scmp.eq.s32.totalorder %s23, 1
      %p101 = por %p99, %p100
      %p102 = scmp.ne.s32.totalorder %s91, %s92
      %p103 = scmp.eq.s32.totalorder %s23, 0
      %p104 = por %p102, %p103
      %p105 = scmp.ne.s32.totalorder %s91, %s92
      %p106 = scmp.eq.s32.totalorder %s24, 1
      %p107 = por %p105, %p106
      %p109 = scmp.ne.s32.totalorder %s92, %s108
      %p110 = scmp.eq.s32.totalorder %s24, 0
      %p111 = por %p109, %p110
      %s112 = ssub.s32 %s25, %s51
      %s113 = ssub.s32 %s26, %s47
      %s114 = sor.u32 %s112, %s113
      %s115 = ssub.s32 %s28, %s39
      %s116 = sor.u32 %s114, %s115
      %p117 = scmp.eq.s32.totalorder %s116, 0
      %s119 = sadd.s32 %s118, 1
      %s120 = scalar_select %p117, %s118, %s119
      %p123 = pneg %p117
      %p124 = scmp.eq.s32.totalorder %s18, 1
      %p125 = por %p123, %p124
      %p126 = scmp.ne.s32.totalorder %s118, %s121
      %p127 = scmp.eq.s32.totalorder %s18, 0
      %p128 = por %p126, %p127
      %p129 = scmp.ne.s32.totalorder %s118, %s121
      %p130 = scmp.eq.s32.totalorder %s23, 1
      %p131 = por %p129, %p130
      %p132 = scmp.ne.s32.totalorder %s121, %s122
      %p133 = scmp.eq.s32.totalorder %s23, 0
      %p134 = por %p132, %p133
      %p135 = scmp.ne.s32.totalorder %s121, %s122
      %p136 = scmp.eq.s32.totalorder %s24, 1
      %p137 = por %p135, %p136
      %p139 = scmp.ne.s32.totalorder %s122, %s138
      %p140 = scmp.eq.s32.totalorder %s24, 0
      %p141 = por %p139, %p140
      %s142 = ssub.s32 %s25, %s51
      %s143 = ssub.s32 %s26, %s47
      %s144 = sor.u32 %s142, %s143
      %s145 = ssub.s32 %s27, %s43
      %s146 = sor.u32 %s144, %s145
      %p147 = scmp.eq.s32.totalorder %s146, 0
      %s149 = sadd.s32 %s148, 1
      %s150 = scalar_select %p147, %s148, %s149
      %p153 = pneg %p147
      %p154 = scmp.eq.s32.totalorder %s18, 1
      %p155 = por %p153, %p154
      %p156 = scmp.ne.s32.totalorder %s148, %s151
      %p157 = scmp.eq.s32.totalorder %s18, 0
      %p158 = por %p156, %p157
      %p159 = scmp.ne.s32.totalorder %s148, %s151
      %p160 = scmp.eq.s32.totalorder %s23, 1
      %p161 = por %p159, %p160
      %p162 = scmp.ne.s32.totalorder %s151, %s152
      %p163 = scmp.eq.s32.totalorder %s23, 0
      %p164 = por %p162, %p163
      %p165 = scmp.ne.s32.totalorder %s151, %s152
      %p166 = scmp.eq.s32.totalorder %s24, 1
      %p167 = por %p165, %p166
      %p169 = scmp.ne.s32.totalorder %s152, %s168
      %p170 = scmp.eq.s32.totalorder %s24, 0
      %p171 = por %p169, %p170
      %p172 = scmp.le.s32.totalorder 1, %s18
      %p173 = scmp.lt.s32.totalorder %s18, 3
      %p174 = pnand %p172, %p173
      %p175 = pneg %p174
      // Predicated region
      $region9: #{tpu_custom_call.1} parent=5 // pred_check
        _
      $region10: #{tpu_custom_call.1} parent=5 // pred_check_branch
        %177 = sbr.rel (%p174) target = $region12
      $region11: #{tpu_custom_call.1} parent=5 // pred_region
        %s178 = ssub.s32 %s18, 1
      $region12: #{tpu_custom_call.1} parent=5 // pred_fallthru
        _
      %p179 = scmp.lt.s32.totalorder %s18, 2
      // Predicated region
      $region13: #{tpu_custom_call.1} parent=5 // pred_check
        %p180 = pneg %p179
      $region14: #{tpu_custom_call.1} parent=5 // pred_check_branch
        %182 = sbr.rel (%p180) target = $region16
      $region15: #{tpu_custom_call.1} parent=5 // pred_region
        // Predicated region
        $region17: #{tpu_custom_call.1} parent=15 // pred_check
          %p183 = pneg %p68
        $region18: #{tpu_custom_call.1} parent=15 // pred_check_branch
          %185 = sbr.rel (%p183) target = $region20
        $region19: #{tpu_custom_call.1} parent=15 // pred_region
          %s186 = sand.u32 %s58, 1
          %s187 = scalar_lea.sflag [#allocation6], %s186
          %s188 = sand.u32 %s58, 1
          %s189 = smul.addr %s188, 32
          %s190 = scalar_lea.vmem [#allocation5], %s189
          %s191 = smul.u32 4, %s26
          %s193 = ssub.s32 512, 512
          %194 = vsyncadd %s187, %s193
          %s195 = sadd.s32 %s27, %s191
          %s196 = smul.addr %s25, 4
          %s197 = sadd.s32 %s195, %s196
          %s198 = smul.addr %s197, 128
          %s199 = scalar_lea.hbm %s0, %s198
          %s200 = sshll.u32 %s190, 4
          %s201 = int_to_ptr.vmem [resolvable:$true] %s200
          %206 = dma.hbm_to_vmem [thread:$0]  %s199, 512, %s201, %s187, 128, 128, 8
        $region20: #{tpu_custom_call.1} parent=15 // pred_fallthru
          _
        // Predicated region
        $region21: #{tpu_custom_call.1} parent=15 // pred_check
          %p207 = pneg %p98
        $region22: #{tpu_custom_call.1} parent=15 // pred_check_branch
          %209 = sbr.rel (%p207) target = $region24
        $region23: #{tpu_custom_call.1} parent=15 // pred_region
          %s210 = sand.u32 %s18, 1
          %s211 = scalar_lea.sflag [#allocation9], %s210
          %s212 = sand.u32 %s88, 1
          %s213 = smul.addr %s212, 32
          %s214 = scalar_lea.vmem [#allocation8], %s213
          %s215 = smul.u32 4, %s26
          %s217 = ssub.s32 512, 512
          %218 = vsyncadd %s211, %s217
          %s219 = sadd.s32 %s28, %s215
          %s220 = smul.addr %s25, 4
          %s221 = sadd.s32 %s219, %s220
          %s222 = smul.addr %s221, 128
          %s223 = scalar_lea.hbm %s1, %s222
          %s224 = sshll.u32 %s214, 4
          %s225 = int_to_ptr.vmem [resolvable:$true] %s224
          %230 = dma.hbm_to_vmem [thread:$0]  %s223, 512, %s225, %s211, 128, 128, 8
        $region24: #{tpu_custom_call.1} parent=15 // pred_fallthru
          _
        // Predicated region
        $region25: #{tpu_custom_call.1} parent=15 // pred_check
          %p231 = pneg %p128
        $region26: #{tpu_custom_call.1} parent=15 // pred_check_branch
          %233 = sbr.rel (%p231) target = $region28
        $region27: #{tpu_custom_call.1} parent=15 // pred_region
          %s234 = sand.u32 %s18, 1
          %s235 = scalar_lea.sflag [#allocation9], %s234
          %s236 = sand.u32 %s118, 1
          %s237 = smul.addr %s236, 32
          %s238 = scalar_lea.vmem [#allocation10], %s237
          %s239 = smul.u32 4, %s26
          %s241 = ssub.s32 512, 512
          %242 = vsyncadd %s235, %s241
          %s243 = sadd.s32 %s28, %s239
          %s244 = smul.addr %s25, 4
          %s245 = sadd.s32 %s243, %s244
          %s246 = smul.addr %s245, 128
          %s247 = scalar_lea.hbm %s2, %s246
          %s248 = sshll.u32 %s238, 4
          %s249 = int_to_ptr.vmem [resolvable:$true] %s248
          %254 = dma.hbm_to_vmem [thread:$0]  %s247, 512, %s249, %s235, 128, 128, 8
        $region28: #{tpu_custom_call.1} parent=15 // pred_fallthru
          _
      $region16: #{tpu_custom_call.1} parent=5 // pred_fallthru
        _
      %p255 = scmp.le.s32.totalorder 1, %s18
      %p256 = scmp.lt.s32.totalorder %s18, 3
      %p257 = pnand %p255, %p256
      %p258 = pneg %p257
      // Predicated region
      $region29: #{tpu_custom_call.1} parent=5 // pred_check
        _
      $region30: #{tpu_custom_call.1} parent=5 // pred_check_branch
        %260 = sbr.rel (%p257) target = $region32
      $region31: #{tpu_custom_call.1} parent=5 // pred_region
        %s261 = ssub.s32 %s18, 1
        %s262 = sand.u32 %s61, 1
        %s263 = scalar_lea.sflag [#allocation6], %s262
        %s264 = sand.u32 %s61, 1
        %s265 = smul.addr %s264, 32
        %s266 = scalar_lea.vmem [#allocation5], %s265
        // Predicated region
        $region33: #{tpu_custom_call.1} parent=31 // pred_check
          %p267 = pneg %p74
        $region34: #{tpu_custom_call.1} parent=31 // pred_check_branch
          %269 = sbr.rel (%p267) target = $region36
        $region35: #{tpu_custom_call.1} parent=31 // pred_region
          %270 = dma.done %s263, 512
        $region36: #{tpu_custom_call.1} parent=31 // pred_fallthru
          _
        %s271 = sand.u32 %s23, 1
        %s272 = scalar_lea.sflag [#allocation9], %s271
        %s273 = sand.u32 %s91, 1
        %s274 = smul.addr %s273, 32
        %s275 = scalar_lea.vmem [#allocation8], %s274
        // Predicated region
        $region37: #{tpu_custom_call.1} parent=31 // pred_check
          %p276 = pneg %p104
        $region38: #{tpu_custom_call.1} parent=31 // pred_check_branch
          %278 = sbr.rel (%p276) target = $region40
        $region39: #{tpu_custom_call.1} parent=31 // pred_region
          %279 = dma.done %s272, 512
        $region40: #{tpu_custom_call.1} parent=31 // pred_fallthru
          _
        %s280 = sand.u32 %s23, 1
        %s281 = scalar_lea.sflag [#allocation9], %s280
        %s282 = sand.u32 %s121, 1
        %s283 = smul.addr %s282, 32
        %s284 = scalar_lea.vmem [#allocation10], %s283
        // Predicated region
        $region41: #{tpu_custom_call.1} parent=31 // pred_check
          %p285 = pneg %p134
        $region42: #{tpu_custom_call.1} parent=31 // pred_check_branch
          %287 = sbr.rel (%p285) target = $region44
        $region43: #{tpu_custom_call.1} parent=31 // pred_region
          %288 = dma.done %s281, 512
        $region44: #{tpu_custom_call.1} parent=31 // pred_fallthru
          _
        %s289 = sand.u32 %s61, 1
        %s290 = scalar_lea.sflag [#allocation6], %s289
        %s291 = sand.u32 %s61, 1
        %s292 = smul.addr %s291, 32
        %s293 = scalar_lea.vmem [#allocation5], %s292
        %p294 = pneg %p74
        %p295 = pneg %p71
        %s296 = sand.u32 %s23, 1
        %s297 = scalar_lea.sflag [#allocation9], %s296
        %s298 = sand.u32 %s91, 1
        %s299 = smul.addr %s298, 32
        %s300 = scalar_lea.vmem [#allocation8], %s299
        %p301 = pneg %p104
        %p302 = pneg %p101
        %s303 = sand.u32 %s23, 1
        %s304 = scalar_lea.sflag [#allocation9], %s303
        %s305 = sand.u32 %s121, 1
        %s306 = smul.addr %s305, 32
        %s307 = scalar_lea.vmem [#allocation10], %s306
        %p308 = pneg %p134
        %p309 = pneg %p131
        %p310 = pneg %p164
        %p311 = pneg %p161
        %s312 = sand.u32 %s151, 1
        %s313 = scalar_lea.sflag [#allocation7], %s312
        %s314 = sand.u32 %s151, 1
        %s315 = smul.addr %s314, 32
        %s316 = scalar_lea.vmem [#allocation11], %s315
        %s317 = smul.u32 4, %s30
        %s318 = smul.u32 4, %s30
        %s319 = smul.u32 4, %s30
        %s320 = smul.u32 4, %s30
        %p321 = scmp.eq.s32.totalorder %s32, 0
        // Predicated region
        $region45: #{tpu_custom_call.1} parent=31 // pred_check
          %p322 = pneg %p321
        $region46: #{tpu_custom_call.1} parent=31 // pred_check_branch
          %324 = sbr.rel (%p322) target = $region48
        $region47: #{tpu_custom_call.1} parent=31 // pred_region
          %vm325 = vcmask 7168
          %326 = vst.msk [vmem:[#allocation2] sm:$0xff] %vm325, -inf
          %327 = vst.msk [vmem:[#allocation2 + $0x8] sm:$0xff] %vm325, -inf
          %328 = vst.msk [vmem:[#allocation2 + $0x10] sm:$0xff] %vm325, -inf
          %329 = vst.msk [vmem:[#allocation2 + $0x18] sm:$0xff] %vm325, -inf
          %330 = vst.msk [vmem:[#allocation3] sm:$0xff] %vm325, 0.0
          %331 = vst.msk [vmem:[#allocation3 + $0x8] sm:$0xff] %vm325, 0.0
          %332 = vst.msk [vmem:[#allocation3 + $0x10] sm:$0xff] %vm325, 0.0
          %333 = vst.msk [vmem:[#allocation3 + $0x18] sm:$0xff] %vm325, 0.0
          %vm334 = vcmask 261120
          %335 = vst.msk [vmem:[#allocation4] sm:$0xff] %vm334, 0.0
          %336 = vst.msk [vmem:[#allocation4 + $0x8] sm:$0xff] %vm334, 0.0
          %337 = vst.msk [vmem:[#allocation4 + $0x10] sm:$0xff] %vm334, 0.0
          %338 = vst.msk [vmem:[#allocation4 + $0x18] sm:$0xff] %vm334, 0.0
        $region48: #{tpu_custom_call.1} parent=31 // pred_fallthru
          _
        %v339 = vld [vmem:[%s266] sm:$0xff]
        %v340 = vld [vmem:[%s266 + $0x8] sm:$0xff]
        %v341 = vld [vmem:[%s266 + $0x10] sm:$0xff]
        %v342 = vld [vmem:[%s266 + $0x18] sm:$0xff]
        %v343 = vld [vmem:[%s275] sm:$0xff]
        %v344 = vld [vmem:[%s275 + $0x8] sm:$0xff]
        %v345 = vld [vmem:[%s275 + $0x10] sm:$0xff]
        %v346 = vld [vmem:[%s275 + $0x18] sm:$0xff]
        %v347 = vld [vmem:[%s284] sm:$0xff]
        %v348 = vld [vmem:[%s284 + $0x8] sm:$0xff]
        %v349 = vld [vmem:[%s284 + $0x10] sm:$0xff]
        %v350 = vld [vmem:[%s284 + $0x18] sm:$0xff]
        %v351 = vmul.f32 %v339, 0.17677669
        %v352 = vmul.f32 %v340, 0.17677669
        %v353 = vmul.f32 %v341, 0.17677669
        %v354 = vmul.f32 %v342, 0.17677669
        %vm355 = vcmask 261120
        %v357 = vsel %vm355, %v351, 0
        %v360 = vsel %vm355, %v343, 0
        %362 = vmatprep.subr.mxu0 0.0
        %363 = vmatpush1.xpose.msra.mxu0 %v360
        %364 = vmatprep.subr.mxu0 0.0
        %365 = vmatpush1.xpose.msra.mxu0 0.0
        %366 = vmatprep.subr.mxu0 0.0
        %367 = vmatpush1.xpose.msra.mxu0 0.0
        %368 = vmatprep.subr.mxu0 0.0
        %369 = vmatpush1.xpose.msra.mxu0 0.0
        %370 = vmatprep.subr.mxu0 0.0
        %371 = vmatpush1.xpose.msra.mxu0 0.0
        %372 = vmatprep.subr.mxu0 0.0
        %373 = vmatpush1.xpose.msra.mxu0 0.0
        %374 = vmatprep.subr.mxu0 0.0
        %375 = vmatpush1.xpose.msra.mxu0 0.0
        %376 = vmatprep.subr.mxu0 0.0
        %377 = vmatpush1.xpose.msra.mxu0 0.0
        %378 = vmatprep.subr.mxu0 0.0
        %379 = vmatpush1.xpose.msra.mxu0 0.0
        %380 = vmatprep.subr.mxu0 0.0
        %381 = vmatpush1.xpose.msra.mxu0 0.0
        %382 = vmatprep.subr.mxu0 0.0
        %383 = vmatpush1.xpose.msra.mxu0 0.0
        %384 = vmatprep.subr.mxu0 0.0
        %385 = vmatpush1.xpose.msra.mxu0 0.0
        %386 = vmatprep.subr.mxu0 0.0
        %387 = vmatpush1.xpose.msra.mxu0 0.0
        %388 = vmatprep.subr.mxu0 0.0
        %389 = vmatpush1.xpose.msra.mxu0 0.0
        %390 = vmatprep.subr.mxu0 0.0
        %391 = vmatpush1.xpose.msra.mxu0 0.0
        %392 = vmatprep.subr.mxu0 0.0
        %393 = vmatpush1.xpose.msra.mxu0 0.0
        %394 = vmatprep.subr.mxu0 0.0
        %395 = vmatpush1.xpose.msra.mxu0 0.0
        %396 = vmatprep.subr.mxu0 0.0
        %397 = vmatpush1.xpose.msra.mxu0 0.0
        %398 = vmatprep.subr.mxu0 0.0
        %399 = vmatpush1.xpose.msra.mxu0 0.0
        %400 = vmatprep.subr.mxu0 0.0
        %401 = vmatpush1.xpose.msra.mxu0 0.0
        %402 = vmatprep.subr.mxu0 0.0
        %403 = vmatpush1.xpose.msra.mxu0 0.0
        %404 = vmatprep.subr.mxu0 0.0
        %405 = vmatpush1.xpose.msra.mxu0 0.0
        %406 = vmatprep.subr.mxu0 0.0
        %407 = vmatpush1.xpose.msra.mxu0 0.0
        %408 = vmatprep.subr.mxu0 0.0
        %409 = vmatpush1.xpose.msra.mxu0 0.0
        %410 = vmatprep.subr.mxu0 0.0
        %411 = vmatpush1.xpose.msra.mxu0 0.0
        %412 = vmatprep.subr.mxu0 0.0
        %413 = vmatpush1.xpose.msra.mxu0 0.0
        %414 = vmatprep.subr.mxu0 0.0
        %415 = vmatpush1.xpose.msra.mxu0 0.0
        %416 = vmatprep.subr.mxu0 0.0
        %417 = vmatpush1.xpose.msra.mxu0 0.0
        %418 = vmatprep.subr.mxu0 0.0
        %419 = vmatpush1.xpose.msra.mxu0 0.0
        %420 = vmatprep.subr.mxu0 0.0
        %421 = vmatpush1.xpose.msra.mxu0 0.0
        %422 = vmatprep.subr.mxu0 0.0
        %423 = vmatpush1.xpose.msra.mxu0 0.0
        %424 = vmatprep.subr.mxu0 0.0
        %425 = vmatpush1.xpose.msra.mxu0 0.0
        %426 = vmatprep.mubr.f32.mxu0 0.0
        %427 = vmatmul.mubr.f32.gmra.mrb[0].mxu0 %v357
        %v428 = vpop.f32.mrb[0].mxu0
        %v429 = vadd.f32 0.0, %v428
        %v430 = vpop.f32.mrb[0].mxu0
        %431 = vdwg.mxu0
        %v433 = vsel %vm355, %v352, 0
        %v436 = vsel %vm355, %v344, 0
        %438 = vmatprep.subr.mxu0 0.0
        %439 = vmatpush1.xpose.msra.mxu0 %v436
        %440 = vmatprep.subr.mxu0 0.0
        %441 = vmatpush1.xpose.msra.mxu0 0.0
        %442 = vmatprep.subr.mxu0 0.0
        %443 = vmatpush1.xpose.msra.mxu0 0.0
        %444 = vmatprep.subr.mxu0 0.0
        %445 = vmatpush1.xpose.msra.mxu0 0.0
        %446 = vmatprep.subr.mxu0 0.0
        %447 = vmatpush1.xpose.msra.mxu0 0.0
        %448 = vmatprep.subr.mxu0 0.0
        %449 = vmatpush1.xpose.msra.mxu0 0.0
        %450 = vmatprep.subr.mxu0 0.0
        %451 = vmatpush1.xpose.msra.mxu0 0.0
        %452 = vmatprep.subr.mxu0 0.0
        %453 = vmatpush1.xpose.msra.mxu0 0.0
        %454 = vmatprep.subr.mxu0 0.0
        %455 = vmatpush1.xpose.msra.mxu0 0.0
        %456 = vmatprep.subr.mxu0 0.0
        %457 = vmatpush1.xpose.msra.mxu0 0.0
        %458 = vmatprep.subr.mxu0 0.0
        %459 = vmatpush1.xpose.msra.mxu0 0.0
        %460 = vmatprep.subr.mxu0 0.0
        %461 = vmatpush1.xpose.msra.mxu0 0.0
        %462 = vmatprep.subr.mxu0 0.0
        %463 = vmatpush1.xpose.msra.mxu0 0.0
        %464 = vmatprep.subr.mxu0 0.0
        %465 = vmatpush1.xpose.msra.mxu0 0.0
        %466 = vmatprep.subr.mxu0 0.0
        %467 = vmatpush1.xpose.msra.mxu0 0.0
        %468 = vmatprep.subr.mxu0 0.0
        %469 = vmatpush1.xpose.msra.mxu0 0.0
        %470 = vmatprep.subr.mxu0 0.0
        %471 = vmatpush1.xpose.msra.mxu0 0.0
        %472 = vmatprep.subr.mxu0 0.0
        %473 = vmatpush1.xpose.msra.mxu0 0.0
        %474 = vmatprep.subr.mxu0 0.0
        %475 = vmatpush1.xpose.msra.mxu0 0.0
        %476 = vmatprep.subr.mxu0 0.0
        %477 = vmatpush1.xpose.msra.mxu0 0.0
        %478 = vmatprep.subr.mxu0 0.0
        %479 = vmatpush1.xpose.msra.mxu0 0.0
        %480 = vmatprep.subr.mxu0 0.0
        %481 = vmatpush1.xpose.msra.mxu0 0.0
        %482 = vmatprep.subr.mxu0 0.0
        %483 = vmatpush1.xpose.msra.mxu0 0.0
        %484 = vmatprep.subr.mxu0 0.0
        %485 = vmatpush1.xpose.msra.mxu0 0.0
        %486 = vmatprep.subr.mxu0 0.0
        %487 = vmatpush1.xpose.msra.mxu0 0.0
        %488 = vmatprep.subr.mxu0 0.0
        %489 = vmatpush1.xpose.msra.mxu0 0.0
        %490 = vmatprep.subr.mxu0 0.0
        %491 = vmatpush1.xpose.msra.mxu0 0.0
        %492 = vmatprep.subr.mxu0 0.0
        %493 = vmatpush1.xpose.msra.mxu0 0.0
        %494 = vmatprep.subr.mxu0 0.0
        %495 = vmatpush1.xpose.msra.mxu0 0.0
        %496 = vmatprep.subr.mxu0 0.0
        %497 = vmatpush1.xpose.msra.mxu0 0.0
        %498 = vmatprep.subr.mxu0 0.0
        %499 = vmatpush1.xpose.msra.mxu0 0.0
        %500 = vmatprep.subr.mxu0 0.0
        %501 = vmatpush1.xpose.msra.mxu0 0.0
        %502 = vmatprep.mubr.f32.mxu0 0.0
        %503 = vmatmul.mubr.f32.gmra.mrb[0].mxu0 %v433
        %v504 = vpop.f32.mrb[0].mxu0
        %v505 = vadd.f32 0.0, %v504
        %v506 = vpop.f32.mrb[0].mxu0
        %507 = vdwg.mxu0
        %v509 = vsel %vm355, %v353, 0
        %v512 = vsel %vm355, %v345, 0
        %514 = vmatprep.subr.mxu0 0.0
        %515 = vmatpush1.xpose.msra.mxu0 %v512
        %516 = vmatprep.subr.mxu0 0.0
        %517 = vmatpush1.xpose.msra.mxu0 0.0
        %518 = vmatprep.subr.mxu0 0.0
        %519 = vmatpush1.xpose.msra.mxu0 0.0
        %520 = vmatprep.subr.mxu0 0.0
        %521 = vmatpush1.xpose.msra.mxu0 0.0
        %522 = vmatprep.subr.mxu0 0.0
        %523 = vmatpush1.xpose.msra.mxu0 0.0
        %524 = vmatprep.subr.mxu0 0.0
        %525 = vmatpush1.xpose.msra.mxu0 0.0
        %526 = vmatprep.subr.mxu0 0.0
        %527 = vmatpush1.xpose.msra.mxu0 0.0
        %528 = vmatprep.subr.mxu0 0.0
        %529 = vmatpush1.xpose.msra.mxu0 0.0
        %530 = vmatprep.subr.mxu0 0.0
        %531 = vmatpush1.xpose.msra.mxu0 0.0
        %532 = vmatprep.subr.mxu0 0.0
        %533 = vmatpush1.xpose.msra.mxu0 0.0
        %534 = vmatprep.subr.mxu0 0.0
        %535 = vmatpush1.xpose.msra.mxu0 0.0
        %536 = vmatprep.subr.mxu0 0.0
        %537 = vmatpush1.xpose.msra.mxu0 0.0
        %538 = vmatprep.subr.mxu0 0.0
        %539 = vmatpush1.xpose.msra.mxu0 0.0
        %540 = vmatprep.subr.mxu0 0.0
        %541 = vmatpush1.xpose.msra.mxu0 0.0
        %542 = vmatprep.subr.mxu0 0.0
        %543 = vmatpush1.xpose.msra.mxu0 0.0
        %544 = vmatprep.subr.mxu0 0.0
        %545 = vmatpush1.xpose.msra.mxu0 0.0
        %546 = vmatprep.subr.mxu0 0.0
        %547 = vmatpush1.xpose.msra.mxu0 0.0
        %548 = vmatprep.subr.mxu0 0.0
        %549 = vmatpush1.xpose.msra.mxu0 0.0
        %550 = vmatprep.subr.mxu0 0.0
        %551 = vmatpush1.xpose.msra.mxu0 0.0
        %552 = vmatprep.subr.mxu0 0.0
        %553 = vmatpush1.xpose.msra.mxu0 0.0
        %554 = vmatprep.subr.mxu0 0.0
        %555 = vmatpush1.xpose.msra.mxu0 0.0
        %556 = vmatprep.subr.mxu0 0.0
        %557 = vmatpush1.xpose.msra.mxu0 0.0
        %558 = vmatprep.subr.mxu0 0.0
        %559 = vmatpush1.xpose.msra.mxu0 0.0
        %560 = vmatprep.subr.mxu0 0.0
        %561 = vmatpush1.xpose.msra.mxu0 0.0
        %562 = vmatprep.subr.mxu0 0.0
        %563 = vmatpush1.xpose.msra.mxu0 0.0
        %564 = vmatprep.subr.mxu0 0.0
        %565 = vmatpush1.xpose.msra.mxu0 0.0
        %566 = vmatprep.subr.mxu0 0.0
        %567 = vmatpush1.xpose.msra.mxu0 0.0
        %568 = vmatprep.subr.mxu0 0.0
        %569 = vmatpush1.xpose.msra.mxu0 0.0
        %570 = vmatprep.subr.mxu0 0.0
        %571 = vmatpush1.xpose.msra.mxu0 0.0
        %572 = vmatprep.subr.mxu0 0.0
        %573 = vmatpush1.xpose.msra.mxu0 0.0
        %574 = vmatprep.subr.mxu0 0.0
        %575 = vmatpush1.xpose.msra.mxu0 0.0
        %576 = vmatprep.subr.mxu0 0.0
        %577 = vmatpush1.xpose.msra.mxu0 0.0
        %578 = vmatprep.mubr.f32.mxu0 0.0
        %579 = vmatmul.mubr.f32.gmra.mrb[0].mxu0 %v509
        %v580 = vpop.f32.mrb[0].mxu0
        %v581 = vadd.f32 0.0, %v580
        %v582 = vpop.f32.mrb[0].mxu0
        %583 = vdwg.mxu0
        %v585 = vsel %vm355, %v354, 0
        %v588 = vsel %vm355, %v346, 0
        %590 = vmatprep.subr.mxu0 0.0
        %591 = vmatpush1.xpose.msra.mxu0 %v588
        %592 = vmatprep.subr.mxu0 0.0
        %593 = vmatpush1.xpose.msra.mxu0 0.0
        %594 = vmatprep.subr.mxu0 0.0
        %595 = vmatpush1.xpose.msra.mxu0 0.0
        %596 = vmatprep.subr.mxu0 0.0
        %597 = vmatpush1.xpose.msra.mxu0 0.0
        %598 = vmatprep.subr.mxu0 0.0
        %599 = vmatpush1.xpose.msra.mxu0 0.0
        %600 = vmatprep.subr.mxu0 0.0
        %601 = vmatpush1.xpose.msra.mxu0 0.0
        %602 = vmatprep.subr.mxu0 0.0
        %603 = vmatpush1.xpose.msra.mxu0 0.0
        %604 = vmatprep.subr.mxu0 0.0
        %605 = vmatpush1.xpose.msra.mxu0 0.0
        %606 = vmatprep.subr.mxu0 0.0
        %607 = vmatpush1.xpose.msra.mxu0 0.0
        %608 = vmatprep.subr.mxu0 0.0
        %609 = vmatpush1.xpose.msra.mxu0 0.0
        %610 = vmatprep.subr.mxu0 0.0
        %611 = vmatpush1.xpose.msra.mxu0 0.0
        %612 = vmatprep.subr.mxu0 0.0
        %613 = vmatpush1.xpose.msra.mxu0 0.0
        %614 = vmatprep.subr.mxu0 0.0
        %615 = vmatpush1.xpose.msra.mxu0 0.0
        %616 = vmatprep.subr.mxu0 0.0
        %617 = vmatpush1.xpose.msra.mxu0 0.0
        %618 = vmatprep.subr.mxu0 0.0
        %619 = vmatpush1.xpose.msra.mxu0 0.0
        %620 = vmatprep.subr.mxu0 0.0
        %621 = vmatpush1.xpose.msra.mxu0 0.0
        %622 = vmatprep.subr.mxu0 0.0
        %623 = vmatpush1.xpose.msra.mxu0 0.0
        %624 = vmatprep.subr.mxu0 0.0
        %625 = vmatpush1.xpose.msra.mxu0 0.0
        %626 = vmatprep.subr.mxu0 0.0
        %627 = vmatpush1.xpose.msra.mxu0 0.0
        %628 = vmatprep.subr.mxu0 0.0
        %629 = vmatpush1.xpose.msra.mxu0 0.0
        %630 = vmatprep.subr.mxu0 0.0
        %631 = vmatpush1.xpose.msra.mxu0 0.0
        %632 = vmatprep.subr.mxu0 0.0
        %633 = vmatpush1.xpose.msra.mxu0 0.0
        %634 = vmatprep.subr.mxu0 0.0
        %635 = vmatpush1.xpose.msra.mxu0 0.0
        %636 = vmatprep.subr.mxu0 0.0
        %637 = vmatpush1.xpose.msra.mxu0 0.0
        %638 = vmatprep.subr.mxu0 0.0
        %639 = vmatpush1.xpose.msra.mxu0 0.0
        %640 = vmatprep.subr.mxu0 0.0
        %641 = vmatpush1.xpose.msra.mxu0 0.0
        %642 = vmatprep.subr.mxu0 0.0
        %643 = vmatpush1.xpose.msra.mxu0 0.0
        %644 = vmatprep.subr.mxu0 0.0
        %645 = vmatpush1.xpose.msra.mxu0 0.0
        %646 = vmatprep.subr.mxu0 0.0
        %647 = vmatpush1.xpose.msra.mxu0 0.0
        %648 = vmatprep.subr.mxu0 0.0
        %649 = vmatpush1.xpose.msra.mxu0 0.0
        %650 = vmatprep.subr.mxu0 0.0
        %651 = vmatpush1.xpose.msra.mxu0 0.0
        %652 = vmatprep.subr.mxu0 0.0
        %653 = vmatpush1.xpose.msra.mxu0 0.0
        %654 = vmatprep.mubr.f32.mxu0 0.0
        %655 = vmatmul.mubr.f32.gmra.mrb[0].mxu0 %v585
        %v656 = vpop.f32.mrb[0].mxu0
        %v657 = vadd.f32 0.0, %v656
        %v658 = vpop.f32.mrb[0].mxu0
        %659 = vdwg.mxu0
        %v660 = vld [vmem:[#allocation2] sm:$0xff]
        %v661 = vld [vmem:[#allocation2 + $0x8] sm:$0xff]
        %v662 = vld [vmem:[#allocation2 + $0x10] sm:$0xff]
        %v663 = vld [vmem:[#allocation2 + $0x18] sm:$0xff]
        %vm664 = vcmask 64512
        %v665 = vsel %vm664, %v429, -inf
        %666 = vmax.xlane.f32.xlu0 %v665
        %v667 = vpop.xlane.xlu0 %666
        %v668 = vsel %vm664, %v505, -inf
        %669 = vmax.xlane.f32.xlu0 %v668
        %v670 = vpop.xlane.xlu0 %669
        %v671 = vsel %vm664, %v581, -inf
        %672 = vmax.xlane.f32.xlu0 %v671
        %v673 = vpop.xlane.xlu0 %672
        %v674 = vsel %vm664, %v657, -inf
        %675 = vmax.xlane.f32.xlu0 %v674
        %v676 = vpop.xlane.xlu0 %675
        %v677 = vmax.f32 %v660, %v667
        %v678 = vmax.f32 %v661, %v670
        %v679 = vmax.f32 %v662, %v673
        %v680 = vmax.f32 %v663, %v676
        %v681 = vsub.f32 %v660, %v677
        %v682 = vsub.f32 %v661, %v678
        %v683 = vsub.f32 %v662, %v679
        %v684 = vsub.f32 %v663, %v680
        %v685 = vmul.f32 %v681, 1.442695
        %v686 = vpow.pop %v685
        %v687 = vmul.f32 %v682, 1.442695
        %v688 = vpow.pop %v687
        %v689 = vmul.f32 %v683, 1.442695
        %v690 = vpow.pop %v689
        %v691 = vmul.f32 %v684, 1.442695
        %v692 = vpow.pop %v691
        %694 = vset.pattern.permute.xlu0 0
        %695 = vperm.xlu0 %694, %v677
        %v696 = vpop.permute.xlu0 %695
        %699 = vset.pattern.permute.xlu0 0
        %700 = vperm.xlu0 %699, %v678
        %v701 = vpop.permute.xlu0 %700
        %704 = vset.pattern.permute.xlu0 0
        %705 = vperm.xlu0 %704, %v679
        %v706 = vpop.permute.xlu0 %705
        %709 = vset.pattern.permute.xlu0 0
        %710 = vperm.xlu0 %709, %v680
        %v711 = vpop.permute.xlu0 %710
        %v713 = vsub.f32 %v429, %v696
        %v714 = vsub.f32 %v505, %v701
        %v715 = vsub.f32 %v581, %v706
        %v716 = vsub.f32 %v657, %v711
        %v717 = vmul.f32 %v713, 1.442695
        %v718 = vpow.pop %v717
        %v719 = vmul.f32 %v714, 1.442695
        %v720 = vpow.pop %v719
        %v721 = vmul.f32 %v715, 1.442695
        %v722 = vpow.pop %v721
        %v723 = vmul.f32 %v716, 1.442695
        %v724 = vpow.pop %v723
        %v725 = vld [vmem:[#allocation3] sm:$0xff]
        %v726 = vld [vmem:[#allocation3 + $0x8] sm:$0xff]
        %v727 = vld [vmem:[#allocation3 + $0x10] sm:$0xff]
        %v728 = vld [vmem:[#allocation3 + $0x18] sm:$0xff]
        %v729 = vmul.f32 %v686, %v725
        %v730 = vmul.f32 %v688, %v726
        %v731 = vmul.f32 %v690, %v727
        %v732 = vmul.f32 %v692, %v728
        %v733 = vsel %vm664, %v718, 0.0
        %734 = vadd.xlane.f32.xlu0 %v733
        %v735 = vpop.xlane.xlu0 %734
        %v736 = vsel %vm664, %v720, 0.0
        %737 = vadd.xlane.f32.xlu0 %v736
        %v738 = vpop.xlane.xlu0 %737
        %v739 = vsel %vm664, %v722, 0.0
        %740 = vadd.xlane.f32.xlu0 %v739
        %v741 = vpop.xlane.xlu0 %740
        %v742 = vsel %vm664, %v724, 0.0
        %743 = vadd.xlane.f32.xlu0 %v742
        %v744 = vpop.xlane.xlu0 %743
        %v745 = vadd.f32 %v729, %v735
        %v746 = vadd.f32 %v730, %v738
        %v747 = vadd.f32 %v731, %v741
        %v748 = vadd.f32 %v732, %v744
        %vm749 = vcmask 7168
        %750 = vst.msk [vmem:[#allocation3] sm:$0xff] %vm749, %v745
        %751 = vst.msk [vmem:[#allocation3 + $0x8] sm:$0xff] %vm749, %v746
        %752 = vst.msk [vmem:[#allocation3 + $0x10] sm:$0xff] %vm749, %v747
        %753 = vst.msk [vmem:[#allocation3 + $0x18] sm:$0xff] %vm749, %v748
        %v754 = vld [vmem:[#allocation4] sm:$0xff]
        %v755 = vld [vmem:[#allocation4 + $0x8] sm:$0xff]
        %v756 = vld [vmem:[#allocation4 + $0x10] sm:$0xff]
        %v757 = vld [vmem:[#allocation4 + $0x18] sm:$0xff]
        %759 = vset.pattern.permute.xlu0 0
        %760 = vperm.xlu0 %759, %v686
        %v761 = vpop.permute.xlu0 %760
        %764 = vset.pattern.permute.xlu0 0
        %765 = vperm.xlu0 %764, %v688
        %v766 = vpop.permute.xlu0 %765
        %769 = vset.pattern.permute.xlu0 0
        %770 = vperm.xlu0 %769, %v690
        %v771 = vpop.permute.xlu0 %770
        %774 = vset.pattern.permute.xlu0 0
        %775 = vperm.xlu0 %774, %v692
        %v776 = vpop.permute.xlu0 %775
        %v778 = vmul.f32 %v761, %v754
        %v779 = vmul.f32 %v766, %v755
        %v780 = vmul.f32 %v771, %v756
        %v781 = vmul.f32 %v776, %v757
        %v783 = vsel %vm664, %v718, 0
        %785 = vmatprep.subr.mxu0 0.0
        %786 = vmatpush1.msra.mxu0 %v347
        %787 = vmatprep.subr.mxu0 0.0
        %788 = vmatpush1.msra.mxu0 0.0
        %789 = vmatprep.subr.mxu0 0.0
        %790 = vmatpush1.msra.mxu0 0.0
        %791 = vmatprep.subr.mxu0 0.0
        %792 = vmatpush1.msra.mxu0 0.0
        %793 = vmatprep.subr.mxu0 0.0
        %794 = vmatpush1.msra.mxu0 0.0
        %795 = vmatprep.subr.mxu0 0.0
        %796 = vmatpush1.msra.mxu0 0.0
        %797 = vmatprep.subr.mxu0 0.0
        %798 = vmatpush1.msra.mxu0 0.0
        %799 = vmatprep.subr.mxu0 0.0
        %800 = vmatpush1.msra.mxu0 0.0
        %801 = vmatprep.subr.mxu0 0.0
        %802 = vmatpush1.msra.mxu0 0.0
        %803 = vmatprep.subr.mxu0 0.0
        %804 = vmatpush1.msra.mxu0 0.0
        %805 = vmatprep.subr.mxu0 0.0
        %806 = vmatpush1.msra.mxu0 0.0
        %807 = vmatprep.subr.mxu0 0.0
        %808 = vmatpush1.msra.mxu0 0.0
        %809 = vmatprep.subr.mxu0 0.0
        %810 = vmatpush1.msra.mxu0 0.0
        %811 = vmatprep.subr.mxu0 0.0
        %812 = vmatpush1.msra.mxu0 0.0
        %813 = vmatprep.subr.mxu0 0.0
        %814 = vmatpush1.msra.mxu0 0.0
        %815 = vmatprep.subr.mxu0 0.0
        %816 = vmatpush1.msra.mxu0 0.0
        %817 = vmatprep.subr.mxu0 0.0
        %818 = vmatpush1.msra.mxu0 0.0
        %819 = vmatprep.subr.mxu0 0.0
        %820 = vmatpush1.msra.mxu0 0.0
        %821 = vmatprep.subr.mxu0 0.0
        %822 = vmatpush1.msra.mxu0 0.0
        %823 = vmatprep.subr.mxu0 0.0
        %824 = vmatpush1.msra.mxu0 0.0
        %825 = vmatprep.subr.mxu0 0.0
        %826 = vmatpush1.msra.mxu0 0.0
        %827 = vmatprep.subr.mxu0 0.0
        %828 = vmatpush1.msra.mxu0 0.0
        %829 = vmatprep.subr.mxu0 0.0
        %830 = vmatpush1.msra.mxu0 0.0
        %831 = vmatprep.subr.mxu0 0.0
        %832 = vmatpush1.msra.mxu0 0.0
        %833 = vmatprep.subr.mxu0 0.0
        %834 = vmatpush1.msra.mxu0 0.0
        %835 = vmatprep.subr.mxu0 0.0
        %836 = vmatpush1.msra.mxu0 0.0
        %837 = vmatprep.subr.mxu0 0.0
        %838 = vmatpush1.msra.mxu0 0.0
        %839 = vmatprep.subr.mxu0 0.0
        %840 = vmatpush1.msra.mxu0 0.0
        %841 = vmatprep.subr.mxu0 0.0
        %842 = vmatpush1.msra.mxu0 0.0
        %843 = vmatprep.subr.mxu0 0.0
        %844 = vmatpush1.msra.mxu0 0.0
        %845 = vmatprep.subr.mxu0 0.0
        %846 = vmatpush1.msra.mxu0 0.0
        %847 = vmatprep.subr.mxu0 0.0
        %848 = vmatpush1.msra.mxu0 0.0
        %849 = vmatprep.mubr.f32.mxu0 0.0
        %850 = vmatmul.mubr.f32.gmra.mrb[0].mxu0 %v783
        %v851 = vpop.f32.mrb[0].mxu0
        %v852 = vadd.f32 0.0, %v851
        %v853 = vpop.f32.mrb[0].mxu0
        %854 = vdwg.mxu0
        %v856 = vsel %vm664, %v720, 0
        %858 = vmatprep.subr.mxu0 0.0
        %859 = vmatpush1.msra.mxu0 %v348
        %860 = vmatprep.subr.mxu0 0.0
        %861 = vmatpush1.msra.mxu0 0.0
        %862 = vmatprep.subr.mxu0 0.0
        %863 = vmatpush1.msra.mxu0 0.0
        %864 = vmatprep.subr.mxu0 0.0
        %865 = vmatpush1.msra.mxu0 0.0
        %866 = vmatprep.subr.mxu0 0.0
        %867 = vmatpush1.msra.mxu0 0.0
        %868 = vmatprep.subr.mxu0 0.0
        %869 = vmatpush1.msra.mxu0 0.0
        %870 = vmatprep.subr.mxu0 0.0
        %871 = vmatpush1.msra.mxu0 0.0
        %872 = vmatprep.subr.mxu0 0.0
        %873 = vmatpush1.msra.mxu0 0.0
        %874 = vmatprep.subr.mxu0 0.0
        %875 = vmatpush1.msra.mxu0 0.0
        %876 = vmatprep.subr.mxu0 0.0
        %877 = vmatpush1.msra.mxu0 0.0
        %878 = vmatprep.subr.mxu0 0.0
        %879 = vmatpush1.msra.mxu0 0.0
        %880 = vmatprep.subr.mxu0 0.0
        %881 = vmatpush1.msra.mxu0 0.0
        %882 = vmatprep.subr.mxu0 0.0
        %883 = vmatpush1.msra.mxu0 0.0
        %884 = vmatprep.subr.mxu0 0.0
        %885 = vmatpush1.msra.mxu0 0.0
        %886 = vmatprep.subr.mxu0 0.0
        %887 = vmatpush1.msra.mxu0 0.0
        %888 = vmatprep.subr.mxu0 0.0
        %889 = vmatpush1.msra.mxu0 0.0
        %890 = vmatprep.subr.mxu0 0.0
        %891 = vmatpush1.msra.mxu0 0.0
        %892 = vmatprep.subr.mxu0 0.0
        %893 = vmatpush1.msra.mxu0 0.0
        %894 = vmatprep.subr.mxu0 0.0
        %895 = vmatpush1.msra.mxu0 0.0
        %896 = vmatprep.subr.mxu0 0.0
        %897 = vmatpush1.msra.mxu0 0.0
        %898 = vmatprep.subr.mxu0 0.0
        %899 = vmatpush1.msra.mxu0 0.0
        %900 = vmatprep.subr.mxu0 0.0
        %901 = vmatpush1.msra.mxu0 0.0
        %902 = vmatprep.subr.mxu0 0.0
        %903 = vmatpush1.msra.mxu0 0.0
        %904 = vmatprep.subr.mxu0 0.0
        %905 = vmatpush1.msra.mxu0 0.0
        %906 = vmatprep.subr.mxu0 0.0
        %907 = vmatpush1.msra.mxu0 0.0
        %908 = vmatprep.subr.mxu0 0.0
        %909 = vmatpush1.msra.mxu0 0.0
        %910 = vmatprep.subr.mxu0 0.0
        %911 = vmatpush1.msra.mxu0 0.0
        %912 = vmatprep.subr.mxu0 0.0
        %913 = vmatpush1.msra.mxu0 0.0
        %914 = vmatprep.subr.mxu0 0.0
        %915 = vmatpush1.msra.mxu0 0.0
        %916 = vmatprep.subr.mxu0 0.0
        %917 = vmatpush1.msra.mxu0 0.0
        %918 = vmatprep.subr.mxu0 0.0
        %919 = vmatpush1.msra.mxu0 0.0
        %920 = vmatprep.subr.mxu0 0.0
        %921 = vmatpush1.msra.mxu0 0.0
        %922 = vmatprep.mubr.f32.mxu0 0.0
        %923 = vmatmul.mubr.f32.gmra.mrb[0].mxu0 %v856
        %v924 = vpop.f32.mrb[0].mxu0
        %v925 = vadd.f32 0.0, %v924
        %v926 = vpop.f32.mrb[0].mxu0
        %927 = vdwg.mxu0
        %v929 = vsel %vm664, %v722, 0
        %931 = vmatprep.subr.mxu0 0.0
        %932 = vmatpush1.msra.mxu0 %v349
        %933 = vmatprep.subr.mxu0 0.0
        %934 = vmatpush1.msra.mxu0 0.0
        %935 = vmatprep.subr.mxu0 0.0
        %936 = vmatpush1.msra.mxu0 0.0
        %937 = vmatprep.subr.mxu0 0.0
        %938 = vmatpush1.msra.mxu0 0.0
        %939 = vmatprep.subr.mxu0 0.0
        %940 = vmatpush1.msra.mxu0 0.0
        %941 = vmatprep.subr.mxu0 0.0
        %942 = vmatpush1.msra.mxu0 0.0
        %943 = vmatprep.subr.mxu0 0.0
        %944 = vmatpush1.msra.mxu0 0.0
        %945 = vmatprep.subr.mxu0 0.0
        %946 = vmatpush1.msra.mxu0 0.0
        %947 = vmatprep.subr.mxu0 0.0
        %948 = vmatpush1.msra.mxu0 0.0
        %949 = vmatprep.subr.mxu0 0.0
        %950 = vmatpush1.msra.mxu0 0.0
        %951 = vmatprep.subr.mxu0 0.0
        %952 = vmatpush1.msra.mxu0 0.0
        %953 = vmatprep.subr.mxu0 0.0
        %954 = vmatpush1.msra.mxu0 0.0
        %955 = vmatprep.subr.mxu0 0.0
        %956 = vmatpush1.msra.mxu0 0.0
        %957 = vmatprep.subr.mxu0 0.0
        %958 = vmatpush1.msra.mxu0 0.0
        %959 = vmatprep.subr.mxu0 0.0
        %960 = vmatpush1.msra.mxu0 0.0
        %961 = vmatprep.subr.mxu0 0.0
        %962 = vmatpush1.msra.mxu0 0.0
        %963 = vmatprep.subr.mxu0 0.0
        %964 = vmatpush1.msra.mxu0 0.0
        %965 = vmatprep.subr.mxu0 0.0
        %966 = vmatpush1.msra.mxu0 0.0
        %967 = vmatprep.subr.mxu0 0.0
        %968 = vmatpush1.msra.mxu0 0.0
        %969 = vmatprep.subr.mxu0 0.0
        %970 = vmatpush1.msra.mxu0 0.0
        %971 = vmatprep.subr.mxu0 0.0
        %972 = vmatpush1.msra.mxu0 0.0
        %973 = vmatprep.subr.mxu0 0.0
        %974 = vmatpush1.msra.mxu0 0.0
        %975 = vmatprep.subr.mxu0 0.0
        %976 = vmatpush1.msra.mxu0 0.0
        %977 = vmatprep.subr.mxu0 0.0
        %978 = vmatpush1.msra.mxu0 0.0
        %979 = vmatprep.subr.mxu0 0.0
        %980 = vmatpush1.msra.mxu0 0.0
        %981 = vmatprep.subr.mxu0 0.0
        %982 = vmatpush1.msra.mxu0 0.0
        %983 = vmatprep.subr.mxu0 0.0
        %984 = vmatpush1.msra.mxu0 0.0
        %985 = vmatprep.subr.mxu0 0.0
        %986 = vmatpush1.msra.mxu0 0.0
        %987 = vmatprep.subr.mxu0 0.0
        %988 = vmatpush1.msra.mxu0 0.0
        %989 = vmatprep.subr.mxu0 0.0
        %990 = vmatpush1.msra.mxu0 0.0
        %991 = vmatprep.subr.mxu0 0.0
        %992 = vmatpush1.msra.mxu0 0.0
        %993 = vmatprep.subr.mxu0 0.0
        %994 = vmatpush1.msra.mxu0 0.0
        %995 = vmatprep.mubr.f32.mxu0 0.0
        %996 = vmatmul.mubr.f32.gmra.mrb[0].mxu0 %v929
        %v997 = vpop.f32.mrb[0].mxu0
        %v998 = vadd.f32 0.0, %v997
        %v999 = vpop.f32.mrb[0].mxu0
        %1000 = vdwg.mxu0
        %v1002 = vsel %vm664, %v724, 0
        %1004 = vmatprep.subr.mxu0 0.0
        %1005 = vmatpush1.msra.mxu0 %v350
        %1006 = vmatprep.subr.mxu0 0.0
        %1007 = vmatpush1.msra.mxu0 0.0
        %1008 = vmatprep.subr.mxu0 0.0
        %1009 = vmatpush1.msra.mxu0 0.0
        %1010 = vmatprep.subr.mxu0 0.0
        %1011 = vmatpush1.msra.mxu0 0.0
        %1012 = vmatprep.subr.mxu0 0.0
        %1013 = vmatpush1.msra.mxu0 0.0
        %1014 = vmatprep.subr.mxu0 0.0
        %1015 = vmatpush1.msra.mxu0 0.0
        %1016 = vmatprep.subr.mxu0 0.0
        %1017 = vmatpush1.msra.mxu0 0.0
        %1018 = vmatprep.subr.mxu0 0.0
        %1019 = vmatpush1.msra.mxu0 0.0
        %1020 = vmatprep.subr.mxu0 0.0
        %1021 = vmatpush1.msra.mxu0 0.0
        %1022 = vmatprep.subr.mxu0 0.0
        %1023 = vmatpush1.msra.mxu0 0.0
        %1024 = vmatprep.subr.mxu0 0.0
        %1025 = vmatpush1.msra.mxu0 0.0
        %1026 = vmatprep.subr.mxu0 0.0
        %1027 = vmatpush1.msra.mxu0 0.0
        %1028 = vmatprep.subr.mxu0 0.0
        %1029 = vmatpush1.msra.mxu0 0.0
        %1030 = vmatprep.subr.mxu0 0.0
        %1031 = vmatpush1.msra.mxu0 0.0
        %1032 = vmatprep.subr.mxu0 0.0
        %1033 = vmatpush1.msra.mxu0 0.0
        %1034 = vmatprep.subr.mxu0 0.0
        %1035 = vmatpush1.msra.mxu0 0.0
        %1036 = vmatprep.subr.mxu0 0.0
        %1037 = vmatpush1.msra.mxu0 0.0
        %1038 = vmatprep.subr.mxu0 0.0
        %1039 = vmatpush1.msra.mxu0 0.0
        %1040 = vmatprep.subr.mxu0 0.0
        %1041 = vmatpush1.msra.mxu0 0.0
        %1042 = vmatprep.subr.mxu0 0.0
        %1043 = vmatpush1.msra.mxu0 0.0
        %1044 = vmatprep.subr.mxu0 0.0
        %1045 = vmatpush1.msra.mxu0 0.0
        %1046 = vmatprep.subr.mxu0 0.0
        %1047 = vmatpush1.msra.mxu0 0.0
        %1048 = vmatprep.subr.mxu0 0.0
        %1049 = vmatpush1.msra.mxu0 0.0
        %1050 = vmatprep.subr.mxu0 0.0
        %1051 = vmatpush1.msra.mxu0 0.0
        %1052 = vmatprep.subr.mxu0 0.0
        %1053 = vmatpush1.msra.mxu0 0.0
        %1054 = vmatprep.subr.mxu0 0.0
        %1055 = vmatpush1.msra.mxu0 0.0
        %1056 = vmatprep.subr.mxu0 0.0
        %1057 = vmatpush1.msra.mxu0 0.0
        %1058 = vmatprep.subr.mxu0 0.0
        %1059 = vmatpush1.msra.mxu0 0.0
        %1060 = vmatprep.subr.mxu0 0.0
        %1061 = vmatpush1.msra.mxu0 0.0
        %1062 = vmatprep.subr.mxu0 0.0
        %1063 = vmatpush1.msra.mxu0 0.0
        %1064 = vmatprep.subr.mxu0 0.0
        %1065 = vmatpush1.msra.mxu0 0.0
        %1066 = vmatprep.subr.mxu0 0.0
        %1067 = vmatpush1.msra.mxu0 0.0
        %1068 = vmatprep.mubr.f32.mxu0 0.0
        %1069 = vmatmul.mubr.f32.gmra.mrb[0].mxu0 %v1002
        %v1070 = vpop.f32.mrb[0].mxu0
        %v1071 = vadd.f32 0.0, %v1070
        %v1072 = vpop.f32.mrb[0].mxu0
        %1073 = vdwg.mxu0
        %v1074 = vadd.f32 %v778, %v852
        %v1075 = vadd.f32 %v779, %v925
        %v1076 = vadd.f32 %v780, %v998
        %v1077 = vadd.f32 %v781, %v1071
        %1078 = vst.msk [vmem:[#allocation4] sm:$0xff] %vm355, %v1074
        %1079 = vst.msk [vmem:[#allocation4 + $0x8] sm:$0xff] %vm355, %v1075
        %1080 = vst.msk [vmem:[#allocation4 + $0x10] sm:$0xff] %vm355, %v1076
        %1081 = vst.msk [vmem:[#allocation4 + $0x18] sm:$0xff] %vm355, %v1077
        %1082 = vst.msk [vmem:[#allocation2] sm:$0xff] %vm749, %v677
        %1083 = vst.msk [vmem:[#allocation2 + $0x8] sm:$0xff] %vm749, %v678
        %1084 = vst.msk [vmem:[#allocation2 + $0x10] sm:$0xff] %vm749, %v679
        %1085 = vst.msk [vmem:[#allocation2 + $0x18] sm:$0xff] %vm749, %v680
        // Predicated region
        $region49: #{tpu_custom_call.1} parent=31 // pred_check
          %p1086 = pneg %p321
        $region50: #{tpu_custom_call.1} parent=31 // pred_check_branch
          %1088 = sbr.rel (%p1086) target = $region52
        $region51: #{tpu_custom_call.1} parent=31 // pred_region
          %v1089 = vld [vmem:[#allocation3] sm:$0xff]
          %v1090 = vld [vmem:[#allocation3 + $0x8] sm:$0xff]
          %v1091 = vld [vmem:[#allocation3 + $0x10] sm:$0xff]
          %v1092 = vld [vmem:[#allocation3 + $0x18] sm:$0xff]
          %v1093 = vrcp.pop %v1089
          %v1094 = vrcp.pop %v1090
          %v1095 = vrcp.pop %v1091
          %v1096 = vrcp.pop %v1092
          %v1097 = vmul.f32 %v1089, %v1093
          %v1098 = vmul.f32 %v1090, %v1094
          %v1099 = vmul.f32 %v1091, %v1095
          %v1100 = vmul.f32 %v1092, %v1096
          %v1101 = vsub.f32 2.0, %v1097
          %v1102 = vsub.f32 2.0, %v1098
          %v1103 = vsub.f32 2.0, %v1099
          %v1104 = vsub.f32 2.0, %v1100
          %v1105 = vmul.f32 %v1093, %v1101
          %v1106 = vmul.f32 %v1094, %v1102
          %v1107 = vmul.f32 %v1095, %v1103
          %v1108 = vmul.f32 %v1096, %v1104
          %v1109 = vld [vmem:[#allocation4] sm:$0xff]
          %v1110 = vld [vmem:[#allocation4 + $0x8] sm:$0xff]
          %v1111 = vld [vmem:[#allocation4 + $0x10] sm:$0xff]
          %v1112 = vld [vmem:[#allocation4 + $0x18] sm:$0xff]
          %1114 = vset.pattern.permute.xlu0 0
          %1115 = vperm.xlu0 %1114, %v1105
          %v1116 = vpop.permute.xlu0 %1115
          %1119 = vset.pattern.permute.xlu0 0
          %1120 = vperm.xlu0 %1119, %v1106
          %v1121 = vpop.permute.xlu0 %1120
          %1124 = vset.pattern.permute.xlu0 0
          %1125 = vperm.xlu0 %1124, %v1107
          %v1126 = vpop.permute.xlu0 %1125
          %1129 = vset.pattern.permute.xlu0 0
          %1130 = vperm.xlu0 %1129, %v1108
          %v1131 = vpop.permute.xlu0 %1130
          %v1133 = vmul.f32 %v1109, %v1116
          %v1134 = vmul.f32 %v1110, %v1121
          %v1135 = vmul.f32 %v1111, %v1126
          %v1136 = vmul.f32 %v1112, %v1131
          %1137 = vst.msk [vmem:[%s316] sm:$0xff] %vm355, %v1133
          %1138 = vst.msk [vmem:[%s316 + $0x8] sm:$0xff] %vm355, %v1134
          %1139 = vst.msk [vmem:[%s316 + $0x10] sm:$0xff] %vm355, %v1135
          %1140 = vst.msk [vmem:[%s316 + $0x18] sm:$0xff] %vm355, %v1136
        $region52: #{tpu_custom_call.1} parent=31 // pred_fallthru
          _
        %s1141 = sand.u32 %s151, 1
        %s1142 = scalar_lea.sflag [#allocation7], %s1141
        %s1143 = sand.u32 %s151, 1
        %s1144 = smul.addr %s1143, 32
        %s1145 = scalar_lea.vmem [#allocation11], %s1144
        // Predicated region
        $region53: #{tpu_custom_call.1} parent=31 // pred_check
          %p1146 = pneg %p161
        $region54: #{tpu_custom_call.1} parent=31 // pred_check_branch
          %1148 = sbr.rel (%p1146) target = $region56
        $region55: #{tpu_custom_call.1} parent=31 // pred_region
          %s1149 = smul.u32 4, %s30
          %s1151 = ssub.s32 512, 512
          %1152 = vsyncadd %s1142, %s1151
          %s1153 = sadd.s32 %s31, %s1149
          %s1154 = smul.addr %s29, 4
          %s1155 = sadd.s32 %s1153, %s1154
          %s1156 = smul.addr %s1155, 128
          %s1157 = scalar_lea.hbm %s3, %s1156
          %s1158 = sshll.u32 %s1145, 4
          %s1159 = int_to_ptr.vmem [resolvable:$true] %s1158
          %1164 = dma.vmem_to_hbm [thread:$0]  %s1159, 512, %s1157, %s1142, 128, 128, 8
        $region56: #{tpu_custom_call.1} parent=31 // pred_fallthru
          _
      $region32: #{tpu_custom_call.1} parent=5 // pred_fallthru
        _
      %p1165 = scmp.le.s32.totalorder 2, %s18
      // Predicated region
      $region57: #{tpu_custom_call.1} parent=5 // pred_check
        %p1166 = pneg %p1165
      $region58: #{tpu_custom_call.1} parent=5 // pred_check_branch
        %1168 = sbr.rel (%p1166) target = $region60
      $region59: #{tpu_custom_call.1} parent=5 // pred_region
        %s1169 = ssub.s32 %s18, 2
        // Predicated region
        $region61: #{tpu_custom_call.1} parent=59 // pred_check
          %p1170 = pneg %p167
        $region62: #{tpu_custom_call.1} parent=59 // pred_check_branch
          %1172 = sbr.rel (%p1170) target = $region64
        $region63: #{tpu_custom_call.1} parent=59 // pred_region
          %s1173 = sand.u32 %s152, 1
          %s1174 = scalar_lea.sflag [#allocation7], %s1173
          %s1175 = sand.u32 %s152, 1
          %s1176 = smul.addr %s1175, 32
          %s1177 = scalar_lea.vmem [#allocation11], %s1176
          %1178 = dma.done %s1174, 512
        $region64: #{tpu_custom_call.1} parent=59 // pred_fallthru
          _
      $region60: #{tpu_custom_call.1} parent=5 // pred_fallthru
        _
    $region6: #{tpu_custom_call.1} parent=1 // loop_footer
      %s22 = sadd.s32 1, %s18
    $region7: #{tpu_custom_call.1} parent=1 // loop_footer_branch
      %17 = sbr.rel target = $region3
    $region8: #{tpu_custom_call.1} parent=1 // loop_exit
      _
    %1179 = vsyncpa [#allocation6], 1
    %s1180 = scalar_lea.sflag [#allocation6], 1
    %1181 = vsyncpa %s1180, 1
    %1182 = vsyncpa [#allocation9], 1
    %s1183 = scalar_lea.sflag [#allocation9], 1
    %1184 = vsyncpa %s1183, 1
    %1185 = vsyncpa [#allocation7], 1
    %s1186 = scalar_lea.sflag [#allocation7], 1
    %1187 = vsyncpa %s1186, 1

</llo_original>
